<compile_context>
chip_gen: v7x
topology: tpu7x:2x2x1
jax: 0.10.0
libtpu: 0.0.40
codegen_flags: <defaults>
</compile_context>

<pallas_src>
import functools

import numpy as np
import jax
import jax.numpy as jnp
from jax.experimental import pallas as pl
from jax.experimental.pallas import tpu as pltpu  # noqa: F401  (kept for parity / future scaling knobs)

# Problem sizes consistent with the module usage.
N, C, H, W = 2, 4, 16, 16
CHAN_REPEATS = 2


# --------------------------------------------------------------------------
# Pallas kernel
# --------------------------------------------------------------------------
def _channel_repeat_kernel(repeats, cb, x_ref, o_ref):
    # x_ref: (N, cb, L)   o_ref: (N, repeats*cb, L)
    x = x_ref[...]
    # Statically unrolled: `repeats` dense stores into channel slabs.
    # out[:, k*cb + c, :] = x[:, c, :]  == torch.Tensor.repeat(1, repeats, 1, 1)
    for k in range(repeats):
        o_ref[:, k * cb:(k + 1) * cb, :] = x


@functools.partial(jax.jit, static_argnames="repeats")
def channel_repeat_pallas(x, repeats=CHAN_REPEATS):
    n, c, h, w = x.shape
    hw = h * w
    # Lane-density guard: keep the last (lane) dim a multiple of 128 when
    # possible.  For the common case fold only H*W into lanes; for odd spatial
    # sizes fold C in as well (semantics-preserving, see header comment).
    if hw % 128 == 0:
        cb, lane = c, hw
    else:
        cb, lane = 1, c * hw

    x3 = x.reshape(n, cb, lane)                   # contiguous reshape (free, wrapper-side)

    out3 = pl.pallas_call(
        functools.partial(_channel_repeat_kernel, repeats, cb),
        out_shape=jax.ShapeDtypeStruct((n, repeats * cb, lane), x.dtype),
        grid=(1,),                                # single step: whole tensor fits VMEM easily
        in_specs=[pl.BlockSpec((n, cb, lane), lambda i: (0, 0, 0))],
        out_specs=pl.BlockSpec((n, repeats * cb, lane), lambda i: (0, 0, 0)),
    )(x3)

    return out3.reshape(n, repeats * c, h, w)     # contiguous reshape (free, wrapper-side)


# --------------------------------------------------------------------------
# Pure-JAX reference (torch.Tensor.repeat == jnp.tile)
# --------------------------------------------------------------------------
def channel_repeat_ref(x, repeats=CHAN_REPEATS):
    return jnp.tile(x, (1, repeats, 1, 1))


if __name__ == "__main__":
    key = jax.random.PRNGKey(0)
    x = jax.random.normal(key, (N, C, H, W), jnp.float32)   # PyTorch NCHW input

    out = jax.block_until_ready(channel_repeat_pallas(x, repeats=CHAN_REPEATS))
    ref = jax.block_until_ready(channel_repeat_ref(x, repeats=CHAN_REPEATS))

    assert out.shape == (N, CHAN_REPEATS * C, H, W)
    if not np.array_equal(np.asarray(out), np.asarray(ref)):
        raise AssertionError("Pallas ChannelRepeat output does not match reference")

    print("KERNEL_OK")
</pallas_src>

<mosaic_0001>
module attributes {stable_mosaic.version = 11 : i64} {
  func.func @_channel_repeat_kernel(%arg0: i32, %arg1: memref<2x4x256xf32, #tpu.memory_space<vmem>>, %arg2: memref<2x8x256xf32, #tpu.memory_space<vmem>>) attributes {dimension_semantics = [#tpu.dimension_semantics<arbitrary>], iteration_bounds = array<i64: 1>, scalar_prefetch = 0 : i64, scratch_operands = 0 : i64, tpu.core_type = #tpu.core_type<tc>, window_params = [{pipeline_mode = #tpu.pipeline_mode<synchronous>, transform_indices = @transform_0, window_bounds = array<i64: 2, 4, 256>}, {pipeline_mode = #tpu.pipeline_mode<synchronous>, transform_indices = @transform_1, window_bounds = array<i64: 2, 8, 256>}]} {
    %c0 = arith.constant 0 : index
    %c0_0 = arith.constant 0 : index
    %c0_1 = arith.constant 0 : index
    %0 = vector.load %arg1[%c0, %c0_0, %c0_1] : memref<2x4x256xf32, #tpu.memory_space<vmem>>, vector<2x4x256xf32>
    %c0_2 = arith.constant 0 : index
    %c0_3 = arith.constant 0 : index
    %c0_4 = arith.constant 0 : index
    %1 = vector.load %arg2[%c0_2, %c0_3, %c0_4] : memref<2x8x256xf32, #tpu.memory_space<vmem>>, vector<2x4x256xf32>
    tpu.vector_store %arg2[%c0_2, %c0_3, %c0_4], %0 {strides = array<i32>} : memref<2x8x256xf32, #tpu.memory_space<vmem>>, vector<2x4x256xf32>,
    %c0_5 = arith.constant 0 : index
    %c4 = arith.constant 4 : index
    %c0_6 = arith.constant 0 : index
    %2 = vector.load %arg2[%c0_5, %c4, %c0_6] : memref<2x8x256xf32, #tpu.memory_space<vmem>>, vector<2x4x256xf32>
    tpu.vector_store %arg2[%c0_5, %c4, %c0_6], %0 {strides = array<i32>} : memref<2x8x256xf32, #tpu.memory_space<vmem>>, vector<2x4x256xf32>,
    return
  }
  func.func @transform_0(%arg0: i32) -> (i32, i32, i32) {
    %c0_i32 = arith.constant 0 : i32
    %c0_i32_0 = arith.constant 0 : i32
    %c0_i32_1 = arith.constant 0 : i32
    %c0_i32_2 = arith.constant 0 : i32
    return %c0_i32, %c0_i32_0, %c0_i32_1 : i32, i32, i32
  }
  func.func @transform_1(%arg0: i32) -> (i32, i32, i32) {
    %c0_i32 = arith.constant 0 : i32
    %c0_i32_0 = arith.constant 0 : i32
    %c0_i32_1 = arith.constant 0 : i32
    %c0_i32_2 = arith.constant 0 : i32
    return %c0_i32, %c0_i32_0, %c0_i32_1 : i32, i32, i32
  }
}

</mosaic_0001>

<llo_original>
// kernel: channel_repeat_pallas.1
$region0: #{channel_repeat_pallas.1}
  #allocation0 [shape = 'u32[]', space=smem, size = 0x4, offset = 0x4, fixed_abs, tag = 'smem constant byte address 0x4 - core index']
  #allocation1 [shape = 'u32[144,128]{1,0:T(1,128)}', space=vmem, size = 0x12000, scoped, tag = 'internal scratch']
  %s0 = inlined_call_operand.vmem [shape: f32[2,4,256], index: 0, kind: input, shape index: {}]
  %s1 = inlined_call_operand.vmem [shape: f32[2,8,256], index: 1, kind: output, shape index: {}]
  %s2 = sld [smem:[#allocation0]]
  $region14: #{channel_repeat_pallas.1} parent=0
    _
  %s4 = ssub.s32 1, %s2
  %s5 = scalar_select 0, %s4, %s2
  // Predicated region
  $region2: #{channel_repeat_pallas.1} parent=0 // pred_check
    _
  $region3: #{channel_repeat_pallas.1} parent=0 // pred_check_branch
    %7 = sbr.rel (0) target = $region5
  $region4: #{channel_repeat_pallas.1} parent=0 // pred_region
    _
  $region5: #{channel_repeat_pallas.1} parent=0 // pred_fallthru
    _
  %v8 = vld [vmem:[%s0] sm:$0xff]
  %v9 = vld [vmem:[%s0 + $0x8] sm:$0xff]
  %v12 = vcombine.high %v8, %v8
  %v13 = vcombine.high %v9, %v9
  %16 = vst [vmem:[%s1] sm:$0xf] %v8
  %17 = vst [vmem:[%s1 + $0x8] sm:$0xf] %v12
  %18 = vst [vmem:[%s1 + $0x10] sm:$0xf] %v9
  %19 = vst [vmem:[%s1 + $0x18] sm:$0xf] %v13
  %v20 = vcombine.low %v8, %v8
  %v21 = vcombine.low %v9, %v9
  %24 = vst [vmem:[%s1] sm:$0xf0] %v20
  %25 = vst [vmem:[%s1 + $0x8] sm:$0xf0] %v8
  %26 = vst [vmem:[%s1 + $0x10] sm:$0xf0] %v21
  %27 = vst [vmem:[%s1 + $0x18] sm:$0xf0] %v9
  // Predicated region
  $region6: #{channel_repeat_pallas.1} parent=0 // pred_check
    _
  $region7: #{channel_repeat_pallas.1} parent=0 // pred_check_branch
    %29 = sbr.rel (0) target = $region9
  $region8: #{channel_repeat_pallas.1} parent=0 // pred_region
    _
  $region9: #{channel_repeat_pallas.1} parent=0 // pred_fallthru
    _
  // Predicated region
  $region10: #{channel_repeat_pallas.1} parent=0 // pred_check
    _
  $region11: #{channel_repeat_pallas.1} parent=0 // pred_check_branch
    %31 = sbr.rel (0) target = $region13
  $region12: #{channel_repeat_pallas.1} parent=0 // pred_region
    _
  $region13: #{channel_repeat_pallas.1} parent=0 // pred_fallthru
    _

</llo_original>
